<compile_context>
chip_gen: v7x
topology: tpu7x:2x2x1
jax: 0.10.0
libtpu: 0.0.40
codegen_flags: <defaults>
</compile_context>

<pallas_src>
import functools

import jax
import jax.numpy as jnp
from jax.experimental import pallas as pl
from jax.experimental.pallas import tpu as pltpu


def shallow_fcn_kernel(u_ref, w_ref, b_ref, o_ref, *, unroll_k):
    # u_ref: [K, TB]        fused input,  feature-major (batch on lanes)
    # w_ref: [N, K]         fused weight, PyTorch [out, in] layout
    # b_ref: [N, 1]         fused bias (A.bias + B.bias)
    # o_ref: [N, TB]        output, feature-major
    u = u_ref[...].astype(jnp.float32)
    w = w_ref[...].astype(jnp.float32)
    bias = b_ref[...].astype(jnp.float32)          # [N, 1]

    n, k = w.shape
    tb = u.shape[1]

    if unroll_k:
        # Tiny contraction (K = n_states + input_size = 3): skip the MXU and
        # use K broadcast multiply-adds on the VPU over the 128-lane batch axis.
        y = jnp.broadcast_to(bias, (n, tb))
        for kk in range(k):
            y = y + w[:, kk:kk + 1] * u[kk:kk + 1, :]
    else:
        # Fallback for large feature sizes: single fused MXU matmul.
        y = jnp.dot(w, u, preferred_element_type=jnp.float32) + bias

    o_ref[...] = jnp.maximum(y, 0.0).astype(o_ref.dtype)


@functools.partial(jax.jit, static_argnames=("block_b",))
def shallow_fcn_forward(z, x, a_w, a_b, b_w, b_b, *, block_b=None):
    """ShallowFCN forward.

    z: [B, n_states], x: [B, input_size].
    a_w: [n_states, n_states], a_b: [n_states]   (PyTorch Linear A, [out, in])
    b_w: [n_states, input_size], b_b: [n_states] (PyTorch Linear B, [out, in])
    Returns [B, n_states].
    """
    B, n_states = z.shape
    _, input_size = x.shape
    K = n_states + input_size

    # ---- wrapper-side layout plumbing (pure data movement, no compute) ----
    # Fused feature-major input: [K, B] so the batch sits on the 128-lane axis.
    u = jnp.concatenate([z, x], axis=1).T                  # [K, B]
    # Fused weight directly in PyTorch [out, in] layout: [n_states, K].
    w = jnp.concatenate([a_w, b_w], axis=1)                # [n_states, K]
    # Fold the two biases into one column vector.
    bias = (a_b + b_b).reshape(n_states, 1)                # [n_states, 1]

    # ---- batch tiling: whole batch resident unless it is very large ----
    if block_b is None:
        # >1 parallel grid steps for big batches (lets v7x use both TCs);
        # otherwise a single grid step — the whole problem is a few KB.
        block_b = 1024 if (B > 1024 and B % 1024 == 0) else B
    block_b = min(block_b, B)
    assert B % block_b == 0, "batch must be a multiple of block_b (pad B)"
    assert block_b == B or block_b % 128 == 0, "batch tiles must be 128-aligned"
    grid = (B // block_b,)

    kernel = functools.partial(shallow_fcn_kernel, unroll_k=(K <= 16))

    out_t = pl.pallas_call(
        kernel,
        out_shape=jax.ShapeDtypeStruct((n_states, B), z.dtype),
        grid_spec=pl.GridSpec(
            grid=grid,
            in_specs=[
                pl.BlockSpec((K, block_b), lambda i: (0, i)),        # fused input tile
                pl.BlockSpec((n_states, K), lambda i: (0, 0)),       # fused weight (resident)
                pl.BlockSpec((n_states, 1), lambda i: (0, 0)),       # fused bias (resident)
            ],
            out_specs=pl.BlockSpec((n_states, block_b), lambda i: (0, i)),
        ),
        compiler_params=pltpu.CompilerParams(
            dimension_semantics=("parallel",)),
    )(u, w, bias)

    # Back to PyTorch batch-major layout [B, n_states].
    return out_t.T


def init_params(key, input_size=1, n_states=2, dtype=jnp.float32):
    """Deterministic init mimicking nn.Linear (uniform +-1/sqrt(fan_in)),
    with the 0.1 weight scaling from ShallowFCN.__init__."""
    k1, k2, k3, k4 = jax.random.split(key, 4)
    bound_a = 1.0 / jnp.sqrt(jnp.asarray(n_states, dtype))
    bound_b = 1.0 / jnp.sqrt(jnp.asarray(input_size, dtype))
    a_w = 0.1 * jax.random.uniform(k1, (n_states, n_states), dtype, -bound_a, bound_a)
    a_b = jax.random.uniform(k2, (n_states,), dtype, -bound_a, bound_a)
    b_w = 0.1 * jax.random.uniform(k3, (n_states, input_size), dtype, -bound_b, bound_b)
    b_b = jax.random.uniform(k4, (n_states,), dtype, -bound_b, bound_b)
    return a_w, a_b, b_w, b_b


if __name__ == "__main__":
    key = jax.random.PRNGKey(0)
    k_z, k_x, k_p = jax.random.split(key, 3)

    batch, n_states, input_size = 16, 2, 1
    z = jax.random.normal(k_z, (batch, n_states), jnp.float32)
    x = jax.random.normal(k_x, (batch, input_size), jnp.float32)
    a_w, a_b, b_w, b_b = init_params(k_p, input_size=input_size, n_states=n_states)

    out = shallow_fcn_forward(z, x, a_w, a_b, b_w, b_b)
    out = jax.block_until_ready(out)

    # Pure-JAX reference of the PyTorch forward semantics.
    ref = jnp.maximum(z @ a_w.T + a_b + x @ b_w.T + b_b, 0.0)
    assert out.shape == (batch, n_states)
    assert jnp.allclose(out, ref, atol=1e-5, rtol=1e-5)

    print("KERNEL_OK")
</pallas_src>

<mosaic_0001>
module attributes {stable_mosaic.version = 11 : i64} {
  func.func @shallow_fcn_kernel(%arg0: i32, %arg1: memref<3x16xf32, #tpu.memory_space<vmem>>, %arg2: memref<2x3xf32, #tpu.memory_space<vmem>>, %arg3: memref<2x1xf32, #tpu.memory_space<vmem>>, %arg4: memref<2x16xf32, #tpu.memory_space<vmem>>) attributes {dimension_semantics = [#tpu.dimension_semantics<parallel>], iteration_bounds = array<i64: 1>, scalar_prefetch = 0 : i64, scratch_operands = 0 : i64, tpu.core_type = #tpu.core_type<tc>, window_params = [{transform_indices = @transform_0, window_bounds = array<i64: 3, 16>}, {pipeline_mode = #tpu.pipeline_mode<synchronous>, transform_indices = @transform_1, window_bounds = array<i64: 2, 3>}, {pipeline_mode = #tpu.pipeline_mode<synchronous>, transform_indices = @transform_2, window_bounds = array<i64: 2, 1>}, {transform_indices = @transform_3, window_bounds = array<i64: 2, 16>}]} {
    %c0 = arith.constant 0 : index
    %c0_0 = arith.constant 0 : index
    %0 = vector.load %arg1[%c0, %c0_0] : memref<3x16xf32, #tpu.memory_space<vmem>>, vector<3x16xf32>
    %c0_1 = arith.constant 0 : index
    %c0_2 = arith.constant 0 : index
    %1 = vector.load %arg2[%c0_1, %c0_2] : memref<2x3xf32, #tpu.memory_space<vmem>>, vector<2x3xf32>
    %c0_3 = arith.constant 0 : index
    %c0_4 = arith.constant 0 : index
    %2 = vector.load %arg3[%c0_3, %c0_4] : memref<2x1xf32, #tpu.memory_space<vmem>>, vector<2x1xf32>
    %3 = vector.shape_cast %2 : vector<2x1xf32> to vector<2x1xf32>
    %4 = vector.broadcast %3 : vector<2x1xf32> to vector<2x16xf32>
    %5 = vector.extract_strided_slice %1 {offsets = [0, 0], sizes = [2, 1], strides = [1, 1]} : vector<2x3xf32> to vector<2x1xf32>
    %6 = vector.extract_strided_slice %0 {offsets = [0, 0], sizes = [1, 16], strides = [1, 1]} : vector<3x16xf32> to vector<1x16xf32>
    %7 = vector.broadcast %5 : vector<2x1xf32> to vector<2x16xf32>
    %8 = vector.broadcast %6 : vector<1x16xf32> to vector<2x16xf32>
    %9 = arith.mulf %7, %8 : vector<2x16xf32>
    %10 = arith.addf %4, %9 : vector<2x16xf32>
    %11 = vector.extract_strided_slice %1 {offsets = [0, 1], sizes = [2, 1], strides = [1, 1]} : vector<2x3xf32> to vector<2x1xf32>
    %12 = vector.extract_strided_slice %0 {offsets = [1, 0], sizes = [1, 16], strides = [1, 1]} : vector<3x16xf32> to vector<1x16xf32>
    %13 = vector.broadcast %11 : vector<2x1xf32> to vector<2x16xf32>
    %14 = vector.broadcast %12 : vector<1x16xf32> to vector<2x16xf32>
    %15 = arith.mulf %13, %14 : vector<2x16xf32>
    %16 = arith.addf %10, %15 : vector<2x16xf32>
    %17 = vector.extract_strided_slice %1 {offsets = [0, 2], sizes = [2, 1], strides = [1, 1]} : vector<2x3xf32> to vector<2x1xf32>
    %18 = vector.extract_strided_slice %0 {offsets = [2, 0], sizes = [1, 16], strides = [1, 1]} : vector<3x16xf32> to vector<1x16xf32>
    %19 = vector.broadcast %17 : vector<2x1xf32> to vector<2x16xf32>
    %20 = vector.broadcast %18 : vector<1x16xf32> to vector<2x16xf32>
    %21 = arith.mulf %19, %20 : vector<2x16xf32>
    %22 = arith.addf %16, %21 : vector<2x16xf32>
    %cst = arith.constant 0.000000e+00 : f32
    %23 = vector.broadcast %cst : f32 to vector<2x16xf32>
    %24 = arith.maximumf %22, %23 : vector<2x16xf32>
    %c0_5 = arith.constant 0 : index
    %c0_6 = arith.constant 0 : index
    %25 = vector.load %arg4[%c0_5, %c0_6] : memref<2x16xf32, #tpu.memory_space<vmem>>, vector<2x16xf32>
    tpu.vector_store %arg4[%c0_5, %c0_6], %24 {strides = array<i32>} : memref<2x16xf32, #tpu.memory_space<vmem>>, vector<2x16xf32>,
    return
  }
  func.func @transform_0(%arg0: i32) -> (i32, i32) {
    %c0_i32 = arith.constant 0 : i32
    %c0_i32_0 = arith.constant 0 : i32
    return %c0_i32, %arg0 : i32, i32
  }
  func.func @transform_1(%arg0: i32) -> (i32, i32) {
    %c0_i32 = arith.constant 0 : i32
    %c0_i32_0 = arith.constant 0 : i32
    %c0_i32_1 = arith.constant 0 : i32
    return %c0_i32, %c0_i32_0 : i32, i32
  }
  func.func @transform_2(%arg0: i32) -> (i32, i32) {
    %c0_i32 = arith.constant 0 : i32
    %c0_i32_0 = arith.constant 0 : i32
    %c0_i32_1 = arith.constant 0 : i32
    return %c0_i32, %c0_i32_0 : i32, i32
  }
  func.func @transform_3(%arg0: i32) -> (i32, i32) {
    %c0_i32 = arith.constant 0 : i32
    %c0_i32_0 = arith.constant 0 : i32
    return %c0_i32, %arg0 : i32, i32
  }
}

</mosaic_0001>

<llo_original>
// kernel: shallow_fcn_forward.1
$region0: #{shallow_fcn_forward.1}
  #allocation0 [shape = 'u32[]', space=smem, size = 0x4, offset = 0x4, fixed_abs, tag = 'smem constant byte address 0x4 - core index']
  #allocation1 [shape = 'u32[144,128]{1,0:T(1,128)}', space=vmem, size = 0x12000, scoped, tag = 'internal scratch']
  %s0 = inlined_call_operand.vmem [shape: f32[3,16], index: 0, kind: input, shape index: {}]
  %s1 = inlined_call_operand.vmem [shape: f32[2,3], index: 1, kind: input, shape index: {}]
  %s2 = inlined_call_operand.vmem [shape: f32[2,1], index: 2, kind: input, shape index: {}]
  %s3 = inlined_call_operand.hbm [shape: f32[2,16], index: 3, kind: output, shape index: {}]
  %s4 = sld [smem:[#allocation0]]
  $region22: #{shallow_fcn_forward.1} parent=0
    _
  %s6 = ssub.s32 1, %s4
  %s7 = scalar_select 0, %s6, %s4
  $region1: #{shallow_fcn_forward.1} parent=0
    #allocation2 [shape = 'u8[1024]{0}', space=vmem, size = 0x400, scoped, tag = 'output window, operand 0, single buffered']
    #allocation3 [shape = 's32[1]{0}', space=sflag, size = 0x4, scoped, tag = 'scoped memory for shallow_fcn_forward.1']
    %8 = vsyncpa [#allocation3], 0
    // Predicated region
    $region2: #{shallow_fcn_forward.1} parent=1 // pred_check
      _
    $region3: #{shallow_fcn_forward.1} parent=1 // pred_check_branch
      %10 = sbr.rel (0) target = $region5
    $region4: #{shallow_fcn_forward.1} parent=1 // pred_region
      _
    $region5: #{shallow_fcn_forward.1} parent=1 // pred_fallthru
      _
    // Predicated region
    $region6: #{shallow_fcn_forward.1} parent=1 // pred_check
      _
    $region7: #{shallow_fcn_forward.1} parent=1 // pred_check_branch
      %12 = sbr.rel (0) target = $region9
    $region8: #{shallow_fcn_forward.1} parent=1 // pred_region
      _
    $region9: #{shallow_fcn_forward.1} parent=1 // pred_fallthru
      _
    // Predicated region
    $region10: #{shallow_fcn_forward.1} parent=1 // pred_check
      _
    $region11: #{shallow_fcn_forward.1} parent=1 // pred_check_branch
      %14 = sbr.rel (0) target = $region13
    $region12: #{shallow_fcn_forward.1} parent=1 // pred_region
      _
    $region13: #{shallow_fcn_forward.1} parent=1 // pred_fallthru
      _
    %v15 = vld [vmem:[%s0] sm:$0x7]
    %v16 = vld [vmem:[%s1] sm:$0x3]
    %v17 = vld [vmem:[%s2] sm:$0x3]
    %19 = vset.pattern.permute.xlu0 0
    %20 = vperm.xlu0 %19, %v17
    %v21 = vpop.permute.xlu0 %20
    %24 = vset.pattern.permute.xlu0 0
    %25 = vperm.xlu0 %24, %v16
    %v26 = vpop.permute.xlu0 %25
    %v28 = vlaneseq
    %v29 = vshrl.u32 %v28, 7
    %v30 = vsub.s32 0, %v29
    %v31 = vrot.slane %v15, %v30
    %v32 = vmul.f32 %v26, %v31
    %v33 = vadd.f32 %v21, %v32
    %34 = vset.pattern.permute.xlu0 1
    %35 = vperm.xlu0 %34, %v16
    %v36 = vpop.permute.xlu0 %35
    %v38 = vlaneseq
    %v39 = vshrl.u32 %v38, 7
    %v40 = vsub.s32 1, %v39
    %v41 = vrot.slane %v15, %v40
    %v42 = vmul.f32 %v36, %v41
    %v43 = vadd.f32 %v33, %v42
    %44 = vset.pattern.permute.xlu0 2
    %45 = vperm.xlu0 %44, %v16
    %v46 = vpop.permute.xlu0 %45
    %v48 = vlaneseq
    %v49 = vshrl.u32 %v48, 7
    %v50 = vsub.s32 2, %v49
    %v51 = vrot.slane %v15, %v50
    %v52 = vmul.f32 %v46, %v51
    %v53 = vadd.f32 %v43, %v52
    %v54 = vmax.f32 %v53, 0.0
    %vm55 = vcmask 123904
    %56 = vst.msk [vmem:[#allocation2] sm:$0x3] %vm55, %v54
    // Predicated region
    $region14: #{shallow_fcn_forward.1} parent=1 // pred_check
      _
    $region15: #{shallow_fcn_forward.1} parent=1 // pred_check_branch
      %58 = sbr.rel (0) target = $region17
    $region16: #{shallow_fcn_forward.1} parent=1 // pred_region
      %s60 = ssub.s32 32, 32
      %61 = vsyncadd [#allocation3], %s60
      %s63 = sshll.u32 [#allocation2], 4
      %s64 = int_to_ptr.vmem [resolvable:$true] %s63
      %66 = dma.vmem_to_hbm [thread:$0]  %s64, 32, %s3, [#allocation3]
    $region17: #{shallow_fcn_forward.1} parent=1 // pred_fallthru
      _
    // Predicated region
    $region18: #{shallow_fcn_forward.1} parent=1 // pred_check
      _
    $region19: #{shallow_fcn_forward.1} parent=1 // pred_check_branch
      %68 = sbr.rel (0) target = $region21
    $region20: #{shallow_fcn_forward.1} parent=1 // pred_region
      %69 = dma.done [#allocation3], 32
    $region21: #{shallow_fcn_forward.1} parent=1 // pred_fallthru
      _
    %70 = vsyncpa [#allocation3], 1

</llo_original>
